<compile_context>
chip_gen: v5e
topology: v5e:2x2
jax: 0.10.0
libtpu: 0.0.40
codegen_flags: <defaults>
</compile_context>

<pallas_src>
import jax
import jax.numpy as jnp
from jax.experimental import pallas as pl
from jax.experimental.pallas import tpu as pltpu

KH = KW = 3  # 3x3 conv, padding=1, stride=1


def conv_matmul_kernel(w_ref, p_ref, o_ref):
    # w_ref: [Cout, K+1]    weights with bias folded into the last column
    # p_ref: [K+1, TILE_M]  im2col patches with a ones-row, lanes = spatial
    # o_ref: [Cout, TILE_M]
    o_ref[...] = jnp.dot(
        w_ref[...], p_ref[...], preferred_element_type=jnp.float32
    ).astype(o_ref.dtype)


def nncs_no_quant_forward(x_nchw, w_oihw, bias):
    """Equivalent of NNCSNoQuant(nn.Conv2d(4, 8, 3, padding=1)).forward(x)."""
    N, Cin, H, W = x_nchw.shape
    Cout = w_oihw.shape[0]
    K = Cin * KH * KW
    M = N * H * W

    # ---- wrapper-side glue (XLA): pad + transposed im2col (spatial-minor) ----
    x_pad = jnp.pad(x_nchw, ((0, 0), (0, 0), (1, 1), (1, 1)))
    taps = [x_pad[:, :, kh:kh + H, kw:kw + W]            # each [N, Cin, H, W]
            for kh in range(KH) for kw in range(KW)]
    patches = jnp.stack(taps, axis=0)                    # [KH*KW, N, Cin, H, W]
    # -> [Cin, KH*KW, N, H, W] -> [Cin*KH*KW, N*H*W]; flattened (cin, kh, kw)
    # order matches w_oihw.reshape(Cout, Cin*KH*KW).
    patches = jnp.transpose(patches, (2, 0, 1, 3, 4)).reshape(K, M)
    patches_ext = jnp.concatenate(
        [patches, jnp.ones((1, M), x_nchw.dtype)], axis=0)           # [K+1, M]

    w_mat = w_oihw.reshape(Cout, K)
    w_ext = jnp.concatenate([w_mat, bias[:, None]], axis=1)          # [Cout, K+1]
    w_ext = w_ext.astype(x_nchw.dtype)

    # Lane-dense tiling over the spatial axis (blocks are multiples of 128).
    assert M % 128 == 0, "N*H*W must be a multiple of 128 for lane-dense tiles"
    tile_m = 256 if M % 256 == 0 else 128
    grid = (M // tile_m,)

    out_t = pl.pallas_call(
        conv_matmul_kernel,
        out_shape=jax.ShapeDtypeStruct((Cout, M), x_nchw.dtype),
        grid=grid,
        in_specs=[
            pl.BlockSpec((Cout, K + 1), lambda i: (0, 0)),     # whole weights
            pl.BlockSpec((K + 1, tile_m), lambda i: (0, i)),   # spatial tile
        ],
        out_specs=pl.BlockSpec((Cout, tile_m), lambda i: (0, i)),
        compiler_params=pltpu.CompilerParams(
            dimension_semantics=("parallel",)),
    )(w_ext, patches_ext)

    # [Cout, N*H*W] -> [N, Cout, H, W]  (PyTorch NCHW convention)
    return jnp.transpose(out_t.reshape(Cout, N, H, W), (1, 0, 2, 3))


if __name__ == "__main__":
    key = jax.random.PRNGKey(0)
    kx, kw, kb = jax.random.split(key, 3)

    N, Cin, H, W = 2, 4, 16, 16
    Cout = 8

    x = jax.random.normal(kx, (N, Cin, H, W), dtype=jnp.float32)
    # Deterministic "Conv2d" parameter init (synthetic, not a checkpoint load).
    fan_in = Cin * KH * KW
    w = jax.random.normal(kw, (Cout, Cin, KH, KW), dtype=jnp.float32) / jnp.sqrt(fan_in)
    b = jax.random.normal(kb, (Cout,), dtype=jnp.float32) * 0.1

    out = jax.block_until_ready(nncs_no_quant_forward(x, w, b))

    # Reference check against XLA's conv (same semantics as torch Conv2d, NCHW/OIHW).
    ref = jax.lax.conv_general_dilated(
        x, w, window_strides=(1, 1), padding="SAME",
        dimension_numbers=("NCHW", "OIHW", "NCHW"),
    ) + b.reshape(1, Cout, 1, 1)
    assert out.shape == (N, Cout, H, W)
    assert jnp.allclose(out, ref, atol=1e-4, rtol=1e-4)

    print("KERNEL_OK")
</pallas_src>

<mosaic_0001>
module attributes {stable_mosaic.version = 11 : i64} {
  func.func @conv_matmul_kernel(%arg0: i32, %arg1: memref<8x37xf32, #tpu.memory_space<vmem>>, %arg2: memref<37x256xf32, #tpu.memory_space<vmem>>, %arg3: memref<8x256xf32, #tpu.memory_space<vmem>>) attributes {dimension_semantics = [#tpu.dimension_semantics<parallel>], iteration_bounds = array<i64: 2>, scalar_prefetch = 0 : i64, scratch_operands = 0 : i64, tpu.core_type = #tpu.core_type<tc>, window_params = [{pipeline_mode = #tpu.pipeline_mode<synchronous>, transform_indices = @transform_0, window_bounds = array<i64: 8, 37>}, {transform_indices = @transform_1, window_bounds = array<i64: 37, 256>}, {transform_indices = @transform_2, window_bounds = array<i64: 8, 256>}]} {
    %c0 = arith.constant 0 : index
    %c0_0 = arith.constant 0 : index
    %0 = vector.load %arg1[%c0, %c0_0] : memref<8x37xf32, #tpu.memory_space<vmem>>, vector<8x37xf32>
    %c0_1 = arith.constant 0 : index
    %c0_2 = arith.constant 0 : index
    %1 = vector.load %arg2[%c0_1, %c0_2] : memref<37x256xf32, #tpu.memory_space<vmem>>, vector<37x256xf32>
    %cst = arith.constant dense<0.000000e+00> : vector<8x256xf32>
    %2 = tpu.matmul %0, %1, %cst {dimension_numbers = #tpu.dot_dimension_numbers<[1], [0], [0], [1], [0, 0, 1, 1], [], []>} : vector<8x37xf32>, vector<37x256xf32>, vector<8x256xf32> -> vector<8x256xf32>
    %c0_3 = arith.constant 0 : index
    %c0_4 = arith.constant 0 : index
    %3 = vector.load %arg3[%c0_3, %c0_4] : memref<8x256xf32, #tpu.memory_space<vmem>>, vector<8x256xf32>
    tpu.vector_store %arg3[%c0_3, %c0_4], %2 {strides = array<i32>} : memref<8x256xf32, #tpu.memory_space<vmem>>, vector<8x256xf32>,
    return
  }
  func.func @transform_0(%arg0: i32) -> (i32, i32) {
    %c0_i32 = arith.constant 0 : i32
    %c0_i32_0 = arith.constant 0 : i32
    %c0_i32_1 = arith.constant 0 : i32
    return %c0_i32, %c0_i32_0 : i32, i32
  }
  func.func @transform_1(%arg0: i32) -> (i32, i32) {
    %c0_i32 = arith.constant 0 : i32
    %c0_i32_0 = arith.constant 0 : i32
    return %c0_i32, %arg0 : i32, i32
  }
  func.func @transform_2(%arg0: i32) -> (i32, i32) {
    %c0_i32 = arith.constant 0 : i32
    %c0_i32_0 = arith.constant 0 : i32
    return %c0_i32, %arg0 : i32, i32
  }
}

</mosaic_0001>

<llo_original>
// kernel: tpu_custom_call.1
$region0: #{tpu_custom_call.1}
  #allocation0 [shape = 'u32[]', space=smem, size = 0x4, offset = 0x4, fixed_abs, tag = 'smem constant byte address 0x4 - core index']
  #allocation1 [shape = 'u32[72,128]{1,0:T(1,128)}', space=vmem, size = 0x9000, scoped, tag = 'internal scratch']
  %s0 = inlined_call_operand.hbm [shape: f32[8,37], index: 0, kind: input, shape index: {}]
  %s1 = inlined_call_operand.hbm [shape: f32[37,512], index: 1, kind: input, shape index: {}]
  %s2 = inlined_call_operand.hbm [shape: f32[8,512], index: 2, kind: output, shape index: {}]
  %s3 = sld [smem:[#allocation0]]
  $region49: #{tpu_custom_call.1} parent=0
    _
  %s5 = ssub.s32 1, %s3
  %s6 = scalar_select 0, %s5, %s3
  $region1: #{tpu_custom_call.1} parent=0
    #allocation2 [shape = 'u8[4096]{0}', space=vmem, size = 0x1000, scoped, tag = 'input window, operand 0, single buffered']
    #allocation3 [shape = 's32[2]{0}', space=sflag, size = 0x8, scoped, tag = 'scoped memory for tpu_custom_call.1']
    #allocation4 [shape = 's32[2]{0}', space=sflag, size = 0x8, scoped, tag = 'scoped memory for tpu_custom_call.1']
    #allocation5 [shape = 'u8[81920]{0}', space=vmem, size = 0x14000, scoped, tag = 'input window, operand 1']
    #allocation6 [shape = 's32[2]{0}', space=sflag, size = 0x8, scoped, tag = 'scoped memory for tpu_custom_call.1']
    #allocation7 [shape = 'u8[16384]{0}', space=vmem, size = 0x4000, scoped, tag = 'output window, operand 0']
    %7 = vsyncpa [#allocation3], 0
    %8 = vsyncpa [#allocation6], 0
    %s9 = scalar_lea.sflag [#allocation6], 1
    %10 = vsyncpa %s9, 0
    %11 = vsyncpa [#allocation4], 0
    %s12 = scalar_lea.sflag [#allocation4], 1
    %13 = vsyncpa %s12, 0
    loop: start=0, step=1, limit=4
    $region2: #{tpu_custom_call.1} parent=1 // loop_pre_header
      _
    $region3: #{tpu_custom_call.1} parent=1 // loop_header
      %s15 = sphi 0, %s19
      %p16 = scmp.ge.s32.totalorder %s15, 4
      %s23 = sphi 0, %s23
      %s25 = sphi 0, %s23
      %s26 = sphi 0, %s25
      %s40 = sphi 0, %s26
      %s46 = sphi 0, %s48
      %s49 = sphi 0, %s46
      %s50 = sphi 0, %s49
      %s66 = sphi 0, %s50
      %s72 = sphi 0, %s74
      %s75 = sphi 0, %s72
      %s76 = sphi 0, %s75
      %s92 = sphi 0, %s76
    $region4: #{tpu_custom_call.1} parent=1 // loop_header_branch
      %18 = sbr.rel (%p16) target = $region8
    $region5: #{tpu_custom_call.1} parent=1 // loop_body
      %s20 = ssub.s32 %s15, 1
      %s21 = ssub.s32 %s15, 2
      %s22 = sadd.s32 %s15, 1
      %s24 = sadd.s32 %s23, 1
      %p27 = scmp.eq.s32.totalorder %s15, 1
      %p28 = scmp.ne.s32.totalorder %s23, %s25
      %p29 = scmp.eq.s32.totalorder %s15, 0
      %p30 = por %p28, %p29
      %p31 = scmp.ne.s32.totalorder %s23, %s25
      %p32 = scmp.eq.s32.totalorder %s20, 1
      %p33 = por %p31, %p32
      %p34 = scmp.ne.s32.totalorder %s25, %s26
      %p35 = scmp.eq.s32.totalorder %s20, 0
      %p36 = por %p34, %p35
      %p37 = scmp.ne.s32.totalorder %s25, %s26
      %p38 = scmp.eq.s32.totalorder %s21, 1
      %p39 = por %p37, %p38
      %p41 = scmp.ne.s32.totalorder %s26, %s40
      %p42 = scmp.eq.s32.totalorder %s21, 0
      %p43 = por %p41, %p42
      %s44 = ssub.s32 %s15, %s22
      %p45 = scmp.eq.s32.totalorder %s44, 0
      %s47 = sadd.s32 %s46, 1
      %s48 = scalar_select %p45, %s46, %s47
      %p51 = pneg %p45
      %p52 = scmp.eq.s32.totalorder %s15, 1
      %p53 = por %p51, %p52
      %p54 = scmp.ne.s32.totalorder %s46, %s49
      %p55 = scmp.eq.s32.totalorder %s15, 0
      %p56 = por %p54, %p55
      %p57 = scmp.ne.s32.totalorder %s46, %s49
      %p58 = scmp.eq.s32.totalorder %s20, 1
      %p59 = por %p57, %p58
      %p60 = scmp.ne.s32.totalorder %s49, %s50
      %p61 = scmp.eq.s32.totalorder %s20, 0
      %p62 = por %p60, %p61
      %p63 = scmp.ne.s32.totalorder %s49, %s50
      %p64 = scmp.eq.s32.totalorder %s21, 1
      %p65 = por %p63, %p64
      %p67 = scmp.ne.s32.totalorder %s50, %s66
      %p68 = scmp.eq.s32.totalorder %s21, 0
      %p69 = por %p67, %p68
      %s70 = ssub.s32 %s15, %s22
      %p71 = scmp.eq.s32.totalorder %s70, 0
      %s73 = sadd.s32 %s72, 1
      %s74 = scalar_select %p71, %s72, %s73
      %p77 = pneg %p71
      %p78 = scmp.eq.s32.totalorder %s15, 1
      %p79 = por %p77, %p78
      %p80 = scmp.ne.s32.totalorder %s72, %s75
      %p81 = scmp.eq.s32.totalorder %s15, 0
      %p82 = por %p80, %p81
      %p83 = scmp.ne.s32.totalorder %s72, %s75
      %p84 = scmp.eq.s32.totalorder %s20, 1
      %p85 = por %p83, %p84
      %p86 = scmp.ne.s32.totalorder %s75, %s76
      %p87 = scmp.eq.s32.totalorder %s20, 0
      %p88 = por %p86, %p87
      %p89 = scmp.ne.s32.totalorder %s75, %s76
      %p90 = scmp.eq.s32.totalorder %s21, 1
      %p91 = por %p89, %p90
      %p93 = scmp.ne.s32.totalorder %s76, %s92
      %p94 = scmp.eq.s32.totalorder %s21, 0
      %p95 = por %p93, %p94
      %p96 = scmp.le.s32.totalorder 1, %s15
      %p97 = scmp.lt.s32.totalorder %s15, 3
      %p98 = pnand %p96, %p97
      %p99 = pneg %p98
      // Predicated region
      $region9: #{tpu_custom_call.1} parent=5 // pred_check
        _
      $region10: #{tpu_custom_call.1} parent=5 // pred_check_branch
        %101 = sbr.rel (%p98) target = $region12
      $region11: #{tpu_custom_call.1} parent=5 // pred_region
        %s102 = ssub.s32 %s15, 1
        // Predicated region
        $region13: #{tpu_custom_call.1} parent=11 // pred_check
          %p103 = pneg %p36
        $region14: #{tpu_custom_call.1} parent=11 // pred_check_branch
          %105 = sbr.rel (%p103) target = $region16
        $region15: #{tpu_custom_call.1} parent=11 // pred_region
          %107 = vsyncadd [#allocation3], 0
          %s109 = sshll.u32 %s0, 4
          %s110 = int_to_ptr.hbm [resolvable:$true] %s109
          %s111 = sshll.u32 [#allocation2], 4
          %s112 = int_to_ptr.vmem [resolvable:$true] %s111
          %114 = dma.hbm_to_vmem [thread:$0]  %s110, 128, %s112, [#allocation3]
        $region16: #{tpu_custom_call.1} parent=11 // pred_fallthru
          _
      $region12: #{tpu_custom_call.1} parent=5 // pred_fallthru
        _
      %p115 = scmp.lt.s32.totalorder %s15, 2
      // Predicated region
      $region17: #{tpu_custom_call.1} parent=5 // pred_check
        %p116 = pneg %p115
      $region18: #{tpu_custom_call.1} parent=5 // pred_check_branch
        %118 = sbr.rel (%p116) target = $region20
      $region19: #{tpu_custom_call.1} parent=5 // pred_region
        // Predicated region
        $region21: #{tpu_custom_call.1} parent=19 // pred_check
          %p119 = pneg %p56
        $region22: #{tpu_custom_call.1} parent=19 // pred_check_branch
          %121 = sbr.rel (%p119) target = $region24
        $region23: #{tpu_custom_call.1} parent=19 // pred_region
          %s122 = sand.u32 %s46, 1
          %s123 = scalar_lea.sflag [#allocation6], %s122
          %s124 = sand.u32 %s46, 1
          %s125 = smul.addr %s124, 80
          %s126 = scalar_lea.vmem [#allocation5], %s125
          %s127 = smul.u32 2, %s15
          %129 = vsyncadd %s123, 0
          %s130 = smul.addr %s127, 8
          %s131 = scalar_lea.hbm %s1, %s130
          %s132 = sshll.u32 %s131, 4
          %s133 = int_to_ptr.hbm [resolvable:$true] %s132
          %s134 = sshll.u32 %s126, 4
          %s135 = int_to_ptr.vmem [resolvable:$true] %s134
          %140 = dma.hbm_to_vmem [thread:$0]  %s133, 1280, %s135, %s123, 512, 256, 16
        $region24: #{tpu_custom_call.1} parent=19 // pred_fallthru
          _
      $region20: #{tpu_custom_call.1} parent=5 // pred_fallthru
        _
      %p141 = scmp.le.s32.totalorder 1, %s15
      %p142 = scmp.lt.s32.totalorder %s15, 3
      %p143 = pnand %p141, %p142
      %p144 = pneg %p143
      // Predicated region
      $region25: #{tpu_custom_call.1} parent=5 // pred_check
        _
      $region26: #{tpu_custom_call.1} parent=5 // pred_check_branch
        %146 = sbr.rel (%p143) target = $region28
      $region27: #{tpu_custom_call.1} parent=5 // pred_region
        %s147 = ssub.s32 %s15, 1
        // Predicated region
        $region29: #{tpu_custom_call.1} parent=27 // pred_check
          %p148 = pneg %p36
        $region30: #{tpu_custom_call.1} parent=27 // pred_check_branch
          %150 = sbr.rel (%p148) target = $region32
        $region31: #{tpu_custom_call.1} parent=27 // pred_region
          %152 = dma.done [#allocation3], 128
        $region32: #{tpu_custom_call.1} parent=27 // pred_fallthru
          _
        %s153 = sand.u32 %s49, 1
        %s154 = scalar_lea.sflag [#allocation6], %s153
        %s155 = sand.u32 %s49, 1
        %s156 = smul.addr %s155, 80
        %s157 = scalar_lea.vmem [#allocation5], %s156
        // Predicated region
        $region33: #{tpu_custom_call.1} parent=27 // pred_check
          %p158 = pneg %p62
        $region34: #{tpu_custom_call.1} parent=27 // pred_check_branch
          %160 = sbr.rel (%p158) target = $region36
        $region35: #{tpu_custom_call.1} parent=27 // pred_region
          %162 = dma.done %s154, 1280
        $region36: #{tpu_custom_call.1} parent=27 // pred_fallthru
          _
        %p163 = pneg %p36
        %p164 = pneg %p33
        %s165 = sand.u32 %s49, 1
        %s166 = scalar_lea.sflag [#allocation6], %s165
        %s167 = sand.u32 %s49, 1
        %s168 = smul.addr %s167, 80
        %s169 = scalar_lea.vmem [#allocation5], %s168
        %p170 = pneg %p62
        %p171 = pneg %p59
        %p172 = pneg %p88
        %p173 = pneg %p85
        %s174 = sand.u32 %s75, 1
        %s175 = scalar_lea.sflag [#allocation4], %s174
        %s176 = sand.u32 %s75, 1
        %s177 = smul.addr %s176, 16
        %s178 = scalar_lea.vmem [#allocation7], %s177
        %s179 = smul.u32 2, %s20
        %s180 = smul.u32 2, %s20
        %v181 = vld [vmem:[#allocation2] sm:$0xff]
        %v182 = vld [vmem:[%s157] sm:$0xff]
        %v183 = vld [vmem:[%s157 + $0x8] sm:$0xff]
        %v184 = vld [vmem:[%s157 + $0x10] sm:$0xff]
        %v185 = vld [vmem:[%s157 + $0x18] sm:$0xff]
        %v186 = vld [vmem:[%s157 + $0x20] sm:$0xff]
        %v187 = vld [vmem:[%s157 + $0x28] sm:$0xff]
        %v188 = vld [vmem:[%s157 + $0x30] sm:$0xff]
        %v189 = vld [vmem:[%s157 + $0x38] sm:$0xff]
        %v190 = vld [vmem:[%s157 + $0x40] sm:$0x1f]
        %v191 = vld [vmem:[%s157 + $0x48] sm:$0x1f]
        %vm192 = vcmask 302080
        %v194 = vsel %vm192, %v181, 0
        %vm196 = vcmask 1044480
        %v198 = vsel %vm196, %v190, 0
        %v201 = vsel %vm196, %v191, 0
        %203 = vmatpush.msra.mxu0 0.0
        %204 = vmatpush.msra.mxu0 0.0
        %205 = vmatpush.msra.mxu0 0.0
        %206 = vmatpush.msra.mxu0 0.0
        %207 = vmatpush.msra.mxu0 0.0
        %208 = vmatpush.msra.mxu0 0.0
        %209 = vmatpush.msra.mxu0 0.0
        %210 = vmatpush.msra.mxu0 0.0
        %211 = vmatpush.msra.mxu0 0.0
        %212 = vmatpush.msra.mxu0 0.0
        %213 = vmatpush.msra.mxu0 0.0
        %214 = vmatpush.msra.mxu0 %v198
        %215 = vmatpush.msra.mxu0 %v188
        %216 = vmatpush.msra.mxu0 %v186
        %217 = vmatpush.msra.mxu0 %v184
        %218 = vmatpush.msra.mxu0 %v182
        %219 = vmatmul.f32.gmra.mxu0 %v194
        %v220 = vpop.f32.mrf.mxu0
        %v221 = vadd.f32 0.0, %v220
        %222 = vdwg.mxu0
        %223 = vmatpush.msra.mxu0 0.0
        %224 = vmatpush.msra.mxu0 0.0
        %225 = vmatpush.msra.mxu0 0.0
        %226 = vmatpush.msra.mxu0 0.0
        %227 = vmatpush.msra.mxu0 0.0
        %228 = vmatpush.msra.mxu0 0.0
        %229 = vmatpush.msra.mxu0 0.0
        %230 = vmatpush.msra.mxu0 0.0
        %231 = vmatpush.msra.mxu0 0.0
        %232 = vmatpush.msra.mxu0 0.0
        %233 = vmatpush.msra.mxu0 0.0
        %234 = vmatpush.msra.mxu0 %v201
        %235 = vmatpush.msra.mxu0 %v189
        %236 = vmatpush.msra.mxu0 %v187
        %237 = vmatpush.msra.mxu0 %v185
        %238 = vmatpush.msra.mxu0 %v183
        %239 = vmatmul.f32.gmra.mxu0 %v194
        %v240 = vpop.f32.mrf.mxu0
        %v241 = vadd.f32 0.0, %v240
        %242 = vdwg.mxu0
        %243 = vst [vmem:[%s178] sm:$0xff] %v221
        %244 = vst [vmem:[%s178 + $0x8] sm:$0xff] %v241
        %s245 = sand.u32 %s75, 1
        %s246 = scalar_lea.sflag [#allocation4], %s245
        %s247 = sand.u32 %s75, 1
        %s248 = smul.addr %s247, 16
        %s249 = scalar_lea.vmem [#allocation7], %s248
        // Predicated region
        $region37: #{tpu_custom_call.1} parent=27 // pred_check
          %p250 = pneg %p85
        $region38: #{tpu_custom_call.1} parent=27 // pred_check_branch
          %252 = sbr.rel (%p250) target = $region40
        $region39: #{tpu_custom_call.1} parent=27 // pred_region
          %s253 = smul.u32 2, %s20
          %255 = vsyncadd %s246, 0
          %s256 = smul.addr %s253, 8
          %s257 = scalar_lea.hbm %s2, %s256
          %s259 = sshll.u32 %s249, 4
          %s260 = int_to_ptr.vmem [resolvable:$true] %s259
          %s261 = sshll.u32 %s257, 4
          %s262 = int_to_ptr.hbm [resolvable:$true] %s261
          %264 = dma.vmem_to_hbm [thread:$0]  %s260, 256, %s262, %s246
        $region40: #{tpu_custom_call.1} parent=27 // pred_fallthru
          _
      $region28: #{tpu_custom_call.1} parent=5 // pred_fallthru
        _
      %p265 = scmp.le.s32.totalorder 2, %s15
      // Predicated region
      $region41: #{tpu_custom_call.1} parent=5 // pred_check
        %p266 = pneg %p265
      $region42: #{tpu_custom_call.1} parent=5 // pred_check_branch
        %268 = sbr.rel (%p266) target = $region44
      $region43: #{tpu_custom_call.1} parent=5 // pred_region
        %s269 = ssub.s32 %s15, 2
        // Predicated region
        $region45: #{tpu_custom_call.1} parent=43 // pred_check
          %p270 = pneg %p91
        $region46: #{tpu_custom_call.1} parent=43 // pred_check_branch
          %272 = sbr.rel (%p270) target = $region48
        $region47: #{tpu_custom_call.1} parent=43 // pred_region
          %s273 = sand.u32 %s76, 1
          %s274 = scalar_lea.sflag [#allocation4], %s273
          %s275 = sand.u32 %s76, 1
          %s276 = smul.addr %s275, 16
          %s277 = scalar_lea.vmem [#allocation7], %s276
          %279 = dma.done %s274, 256
        $region48: #{tpu_custom_call.1} parent=43 // pred_fallthru
          _
      $region44: #{tpu_custom_call.1} parent=5 // pred_fallthru
        _
    $region6: #{tpu_custom_call.1} parent=1 // loop_footer
      %s19 = sadd.s32 1, %s15
    $region7: #{tpu_custom_call.1} parent=1 // loop_footer_branch
      %14 = sbr.rel target = $region3
    $region8: #{tpu_custom_call.1} parent=1 // loop_exit
      _
    %280 = vsyncpa [#allocation3], 1
    %s281 = scalar_lea.sflag [#allocation3], 1
    %282 = vsyncpa %s281, 1
    %283 = vsyncpa [#allocation6], 1
    %s284 = scalar_lea.sflag [#allocation6], 1
    %285 = vsyncpa %s284, 1
    %286 = vsyncpa [#allocation4], 1
    %s287 = scalar_lea.sflag [#allocation4], 1
    %288 = vsyncpa %s287, 1

</llo_original>
